<compile_context>
chip_gen: v7x
topology: tpu7x:2x2x1
jax: 0.10.0
libtpu: 0.0.40
codegen_flags: <defaults>
</compile_context>

<pallas_src>
import jax
import jax.numpy as jnp
from jax.experimental import pallas as pl
from jax.experimental.pallas import tpu as pltpu


def _round_up(x, m):
    return ((x + m - 1) // m) * m


# ----------------------------------------------------------------------------
# Pallas kernel:  out(Cout, TP) = W(Cout, Cin) @ X(Cin, TP) + b(Cout, 1)
# ----------------------------------------------------------------------------
def _head_conv1x1_kernel(x_ref, w_ref, b_ref, o_ref):
    # x_ref: (Cin, TP) input dtype   w_ref: (Cout, Cin) bf16
    # b_ref: (Cout, 1) f32           o_ref: (Cout, TP) output dtype
    acc = jnp.dot(w_ref[...], x_ref[...].astype(w_ref.dtype),
                  preferred_element_type=jnp.float32)
    o_ref[...] = (acc + b_ref[...]).astype(o_ref.dtype)


def _pick_pixel_tile(num_pixels, cin, cout, in_itemsize, out_itemsize,
                     *, max_tile=1024, target_steps=2,
                     block_budget_bytes=16 * 1024 * 1024):
    """Pick the pixel (lane-axis) tile TP.

    - P <= 128: only the full extent is a legal lane block -> single pixel
      step (the batch axis still provides grid steps).
    - Otherwise: a multiple of 128 aimed at >= `target_steps` grid steps (so
      the auto-pipeline has DMA/compute to overlap and v7x megacore gets >= 2
      parallel iterations even at B=1), capped at `max_tile` for long
      contiguous DMA rows, then shrunk while the double-buffered x/out blocks
      would exceed `block_budget_bytes` (sized with v7x's 64 MiB VMEM in
      mind).  Ragged last blocks are handled by Pallas.
    """
    if num_pixels <= 128:
        return num_pixels

    nsteps = max(target_steps, pl.cdiv(num_pixels, max_tile))
    tp = min(max_tile, _round_up(pl.cdiv(num_pixels, nsteps), 128))

    def block_bytes(t):
        return 2 * cin * t * in_itemsize + 2 * cout * t * out_itemsize

    while tp > 128 and block_bytes(tp) > block_budget_bytes:
        tp -= 128
    return tp


def conv1x1_nchw(x_nchw, w_bf16, b_col, *, out_dtype=None, max_pixel_tile=1024):
    """1x1 conv with bias, matching torch.nn.Conv2d(kernel=1) on NCHW input.

    x_nchw: (B, Cin, H, W)
    w_bf16: (Cout, Cin)  bfloat16 weight (torch weight squeezed + pre-cast)
    b_col:  (Cout, 1)    float32 bias column
    out_dtype: output dtype (default: x_nchw.dtype, i.e. torch semantics)
    returns (B, Cout, H, W)
    """
    B, Cin, H, W = x_nchw.shape
    Cout = w_bf16.shape[0]
    P = H * W
    out_dtype = jnp.dtype(x_nchw.dtype if out_dtype is None else out_dtype)

    # Layout-free reshape in NCHW (collapse trailing dims of a row-major array).
    x3 = x_nchw.reshape(B, Cin, P)

    in_isz = jnp.dtype(x_nchw.dtype).itemsize
    out_isz = out_dtype.itemsize
    TP = _pick_pixel_tile(P, Cin, Cout, in_isz, out_isz, max_tile=max_pixel_tile)
    grid = (B, pl.cdiv(P, TP))

    # Honest VMEM budget: double-buffered x / out blocks + (constant-index,
    # still double-buffered by default) weights + bias, with 1.3x margin,
    # floored at the smallest generation scoped default (16 MiB).
    need = (2 * Cin * TP * in_isz                      # x double buffer
            + 2 * Cout * TP * out_isz                  # out double buffer
            + 2 * Cout * Cin * w_bf16.dtype.itemsize   # bf16 weights
            + 2 * Cout * 4)                            # f32 bias
    vmem_limit = max(int(1.3 * need), 16 * 1024 * 1024)

    out = pl.pallas_call(
        _head_conv1x1_kernel,
        out_shape=jax.ShapeDtypeStruct((B, Cout, P), out_dtype),
        grid_spec=pltpu.PrefetchScalarGridSpec(
            num_scalar_prefetch=0,
            grid=grid,
            in_specs=[
                pl.BlockSpec((None, Cin, TP), lambda b, j: (b, 0, j)),
                pl.BlockSpec((Cout, Cin), lambda b, j: (0, 0)),
                pl.BlockSpec((Cout, 1), lambda b, j: (0, 0)),
            ],
            out_specs=pl.BlockSpec((None, Cout, TP), lambda b, j: (b, 0, j)),
        ),
        compiler_params=pltpu.CompilerParams(
            dimension_semantics=("parallel", "parallel"),
            vmem_limit_bytes=vmem_limit),
    )(x3, w_bf16, b_col)

    # Layout-free reshape back to NCHW (split the trailing pixel dim).
    return out.reshape(B, Cout, H, W)


# ----------------------------------------------------------------------------
# HeadV3 module equivalent
# ----------------------------------------------------------------------------
class HeadV3Pallas:
    def __init__(self, in_channels_small, in_channels_medium, in_channels_large,
                 anchors, num_classes, key, out_dtype=None):
        anchors_small, anchors_medium, anchors_large = anchors
        out_small = anchors_small.shape[0] * (5 + num_classes)
        out_medium = anchors_medium.shape[0] * (5 + num_classes)
        out_large = anchors_large.shape[0] * (5 + num_classes)
        self.out_dtype = out_dtype

        ks = jax.random.split(key, 6)

        def init_conv(kw, kb, cin, cout):
            # Deterministic init mimicking torch Conv2d default (uniform fan-in).
            bound = 1.0 / jnp.sqrt(jnp.float32(cin))
            w = jax.random.uniform(kw, (cout, cin), jnp.float32, -bound, bound)
            b = jax.random.uniform(kb, (cout,), jnp.float32, -bound, bound)
            return w, b

        # Full-precision parameters (reference semantics).
        self.w_small, self.b_small = init_conv(ks[0], ks[1],
                                               in_channels_small, out_small)
        self.w_medium, self.b_medium = init_conv(ks[2], ks[3],
                                                 in_channels_medium, out_medium)
        self.w_large, self.b_large = init_conv(ks[4], ks[5],
                                               in_channels_large, out_large)

        # Kernel-layout parameters, precomputed ONCE (no per-call transposes /
        # reshapes / casts in the forward path): bf16 weights for the MXU
        # (explicit precision choice; f32 accumulate), f32 bias as a (Cout, 1)
        # column broadcast over the pixel (lane) axis.
        self._wk_small = self.w_small.astype(jnp.bfloat16)
        self._wk_medium = self.w_medium.astype(jnp.bfloat16)
        self._wk_large = self.w_large.astype(jnp.bfloat16)
        self._bk_small = self.b_small.reshape(-1, 1)
        self._bk_medium = self.b_medium.reshape(-1, 1)
        self._bk_large = self.b_large.reshape(-1, 1)

    def __call__(self, x_small, x_medium, x_large):
        head_out_small = conv1x1_nchw(x_small, self._wk_small, self._bk_small,
                                      out_dtype=self.out_dtype)
        head_out_medium = conv1x1_nchw(x_medium, self._wk_medium, self._bk_medium,
                                       out_dtype=self.out_dtype)
        head_out_large = conv1x1_nchw(x_large, self._wk_large, self._bk_large,
                                      out_dtype=self.out_dtype)
        return head_out_small, head_out_medium, head_out_large


# ----------------------------------------------------------------------------
# Reference (plain JAX, f32) for a correctness check
# ----------------------------------------------------------------------------
def _ref_conv1x1(x, w, b):
    # (B,Cin,H,W), (Cout,Cin), (Cout,) -> (B,Cout,H,W)
    return jnp.einsum("bchw,oc->bohw", x, w) + b[None, :, None, None]


if __name__ == "__main__":
    key = jax.random.PRNGKey(0)
    k_in, k_params = jax.random.split(key)

    # Small shapes consistent with the module's scale pyramid (small scale =
    # most channels / fewest pixels).  Spatial sizes 7 / 13 / 26 exercise both
    # the full-extent single-step path (49 px) and the ragged multi-step
    # pipelined path (169 px -> 2 pixel steps of 128; 676 px -> 2 steps of 384).
    B = 2
    num_classes = 3
    anchors = (jnp.ones((3, 2)), jnp.ones((3, 2)), jnp.ones((3, 2)))
    cin_small, cin_medium, cin_large = 64, 32, 16
    hw_small, hw_medium, hw_large = 7, 13, 26

    k1, k2, k3 = jax.random.split(k_in, 3)
    x_small = jax.random.normal(k1, (B, cin_small, hw_small, hw_small), jnp.float32)
    x_medium = jax.random.normal(k2, (B, cin_medium, hw_medium, hw_medium), jnp.float32)
    x_large = jax.random.normal(k3, (B, cin_large, hw_large, hw_large), jnp.float32)

    head = HeadV3Pallas(cin_small, cin_medium, cin_large, anchors, num_classes,
                        key=k_params)

    out_s, out_m, out_l = head(x_small, x_medium, x_large)
    jax.block_until_ready((out_s, out_m, out_l))

    # Sanity check against plain-JAX f32 reference (bf16 MXU path -> looser tol).
    ref_s = _ref_conv1x1(x_small, head.w_small, head.b_small)
    ref_m = _ref_conv1x1(x_medium, head.w_medium, head.b_medium)
    ref_l = _ref_conv1x1(x_large, head.w_large, head.b_large)

    cout = 3 * (5 + num_classes)
    assert out_s.shape == (B, cout, hw_small, hw_small)
    assert out_m.shape == (B, cout, hw_medium, hw_medium)
    assert out_l.shape == (B, cout, hw_large, hw_large)
    assert jnp.allclose(out_s, ref_s, atol=2e-2, rtol=2e-2)
    assert jnp.allclose(out_m, ref_m, atol=2e-2, rtol=2e-2)
    assert jnp.allclose(out_l, ref_l, atol=2e-2, rtol=2e-2)

    print("KERNEL_OK")
</pallas_src>

<mosaic_0001>
module attributes {stable_mosaic.version = 11 : i64} {
  func.func @_head_conv1x1_kernel(%arg0: i32, %arg1: i32, %arg2: memref<1x64x49xf32, #tpu.memory_space<vmem>>, %arg3: memref<24x64xbf16, #tpu.memory_space<vmem>>, %arg4: memref<24x1xf32, #tpu.memory_space<vmem>>, %arg5: memref<1x24x49xf32, #tpu.memory_space<vmem>>) attributes {dimension_semantics = [#tpu.dimension_semantics<parallel>, #tpu.dimension_semantics<parallel>], iteration_bounds = array<i64: 2, 1>, scalar_prefetch = 0 : i64, scratch_operands = 0 : i64, tpu.core_type = #tpu.core_type<tc>, window_params = [{transform_indices = @transform_0, window_bounds = array<i64: 1, 64, 49>}, {pipeline_mode = #tpu.pipeline_mode<synchronous>, transform_indices = @transform_1, window_bounds = array<i64: 24, 64>}, {pipeline_mode = #tpu.pipeline_mode<synchronous>, transform_indices = @transform_2, window_bounds = array<i64: 24, 1>}, {transform_indices = @transform_3, window_bounds = array<i64: 1, 24, 49>}]} {
    %c0 = arith.constant 0 : index
    %c0_0 = arith.constant 0 : index
    %0 = vector.load %arg3[%c0, %c0_0] : memref<24x64xbf16, #tpu.memory_space<vmem>>, vector<24x64xbf16>
    %c0_1 = arith.constant 0 : index
    %c0_2 = arith.constant 0 : index
    %c0_3 = arith.constant 0 : index
    %1 = vector.load %arg2[%c0_1, %c0_2, %c0_3] : memref<1x64x49xf32, #tpu.memory_space<vmem>>, vector<1x64x49xf32>
    %2 = vector.shape_cast %1 : vector<1x64x49xf32> to vector<64x49xf32>
    %3 = arith.truncf %2 : vector<64x49xf32> to vector<64x49xbf16>
    %cst = arith.constant dense<0.000000e+00> : vector<24x49xf32>
    %4 = tpu.matmul %0, %3, %cst {dimension_numbers = #tpu.dot_dimension_numbers<[1], [0], [0], [1], [0, 0, 1, 1], [], []>} : vector<24x64xbf16>, vector<64x49xbf16>, vector<24x49xf32> -> vector<24x49xf32>
    %c0_4 = arith.constant 0 : index
    %c0_5 = arith.constant 0 : index
    %5 = vector.load %arg4[%c0_4, %c0_5] : memref<24x1xf32, #tpu.memory_space<vmem>>, vector<24x1xf32>
    %6 = vector.broadcast %5 : vector<24x1xf32> to vector<24x49xf32>
    %7 = arith.addf %4, %6 : vector<24x49xf32>
    %c0_6 = arith.constant 0 : index
    %c0_7 = arith.constant 0 : index
    %c0_8 = arith.constant 0 : index
    %8 = vector.load %arg5[%c0_6, %c0_7, %c0_8] : memref<1x24x49xf32, #tpu.memory_space<vmem>>, vector<1x24x49xf32>
    %9 = vector.shape_cast %8 : vector<1x24x49xf32> to vector<24x49xf32>
    %10 = vector.shape_cast %7 : vector<24x49xf32> to vector<1x24x49xf32>
    tpu.vector_store %arg5[%c0_6, %c0_7, %c0_8], %10 {strides = array<i32>} : memref<1x24x49xf32, #tpu.memory_space<vmem>>, vector<1x24x49xf32>,
    return
  }
  func.func @transform_0(%arg0: i32, %arg1: i32) -> (i32, i32, i32) {
    %c0_i32 = arith.constant 0 : i32
    %c0_i32_0 = arith.constant 0 : i32
    return %arg0, %c0_i32, %arg1 : i32, i32, i32
  }
  func.func @transform_1(%arg0: i32, %arg1: i32) -> (i32, i32) {
    %c0_i32 = arith.constant 0 : i32
    %c0_i32_0 = arith.constant 0 : i32
    %c0_i32_1 = arith.constant 0 : i32
    return %c0_i32, %c0_i32_0 : i32, i32
  }
  func.func @transform_2(%arg0: i32, %arg1: i32) -> (i32, i32) {
    %c0_i32 = arith.constant 0 : i32
    %c0_i32_0 = arith.constant 0 : i32
    %c0_i32_1 = arith.constant 0 : i32
    return %c0_i32, %c0_i32_0 : i32, i32
  }
  func.func @transform_3(%arg0: i32, %arg1: i32) -> (i32, i32, i32) {
    %c0_i32 = arith.constant 0 : i32
    %c0_i32_0 = arith.constant 0 : i32
    return %arg0, %c0_i32, %arg1 : i32, i32, i32
  }
}

</mosaic_0001>

<llo_original>
// kernel: tpu_custom_call.1
$region0: #{tpu_custom_call.1}
  #allocation0 [shape = 'u32[]', space=smem, size = 0x4, offset = 0x4, fixed_abs, tag = 'smem constant byte address 0x4 - core index']
  #allocation1 [shape = 'u32[144,128]{1,0:T(1,128)}', space=vmem, size = 0x12000, scoped, tag = 'internal scratch']
  %s0 = inlined_call_operand.vmem [shape: f32[2,64,49], index: 0, kind: input, shape index: {}]
  %s1 = inlined_call_operand.vmem [shape: bf16[24,64], index: 1, kind: input, shape index: {}]
  %s2 = inlined_call_operand.vmem [shape: f32[24,1], index: 2, kind: input, shape index: {}]
  %s3 = inlined_call_operand.hbm [shape: f32[2,24,49], index: 3, kind: output, shape index: {}]
  %s4 = sld [smem:[#allocation0]]
  $region45: #{tpu_custom_call.1} parent=0
    _
  %s6 = ssub.s32 1, %s4
  %s7 = scalar_select 0, %s6, %s4
  $region1: #{tpu_custom_call.1} parent=0
    #allocation2 [shape = 'u8[24576]{0}', space=vmem, size = 0x6000, scoped, tag = 'output window, operand 0']
    #allocation3 [shape = 's32[2]{0}', space=sflag, size = 0x8, scoped, tag = 'scoped memory for tpu_custom_call.1']
    %8 = vsyncpa [#allocation3], 0
    %s9 = scalar_lea.sflag [#allocation3], 1
    %10 = vsyncpa %s9, 0
    loop: start=0, step=1, limit=4
    $region2: #{tpu_custom_call.1} parent=1 // loop_pre_header
      _
    $region3: #{tpu_custom_call.1} parent=1 // loop_header
      %s12 = sphi 0, %s16
      %p13 = scmp.ge.s32.totalorder %s12, 4
      %s19 = sphi 0, %s31
      %s20 = sphi 0, %s27
      %s21 = sphi 0, %s19
      %s22 = sphi 0, %s20
      %s23 = sphi 0, %s21
      %s24 = sphi 0, %s22
      %s36 = sphi 0, %s38
      %s39 = sphi 0, %s36
      %s40 = sphi 0, %s39
      %s56 = sphi 0, %s40
      %s60 = sphi 0, %s60
      %s62 = sphi 0, %s60
      %s63 = sphi 0, %s62
      %s77 = sphi 0, %s63
      %s81 = sphi 0, %s81
      %s83 = sphi 0, %s81
      %s84 = sphi 0, %s83
      %s98 = sphi 0, %s84
      %s106 = sphi 0, %s108
      %s109 = sphi 0, %s106
      %s110 = sphi 0, %s109
      %s126 = sphi 0, %s110
    $region4: #{tpu_custom_call.1} parent=1 // loop_header_branch
      %15 = sbr.rel (%p13) target = $region8
    $region5: #{tpu_custom_call.1} parent=1 // loop_body
      %s17 = ssub.s32 %s12, 1
      %s18 = ssub.s32 %s12, 2
      %s25 = sadd.s32 1, %s20
      %p26 = scmp.ge.s32.totalorder %s25, 1
      %s27 = scalar_select %p26, 0, %s25
      %s28 = sadd.s32 1, %s19
      %s29 = scalar_select %p26, %s28, %s19
      %p30 = scmp.ge.s32.totalorder %s29, 2
      %s31 = scalar_select %p30, 0, %s29
      %s32 = ssub.s32 %s19, %s31
      %s33 = ssub.s32 %s20, %s27
      %s34 = sor.u32 %s32, %s33
      %p35 = scmp.eq.s32.totalorder %s34, 0
      %s37 = sadd.s32 %s36, 1
      %s38 = scalar_select %p35, %s36, %s37
      %p41 = pneg %p35
      %p42 = scmp.eq.s32.totalorder %s12, 1
      %p43 = por %p41, %p42
      %p44 = scmp.ne.s32.totalorder %s36, %s39
      %p45 = scmp.eq.s32.totalorder %s12, 0
      %p46 = por %p44, %p45
      %p47 = scmp.ne.s32.totalorder %s36, %s39
      %p48 = scmp.eq.s32.totalorder %s17, 1
      %p49 = por %p47, %p48
      %p50 = scmp.ne.s32.totalorder %s39, %s40
      %p51 = scmp.eq.s32.totalorder %s17, 0
      %p52 = por %p50, %p51
      %p53 = scmp.ne.s32.totalorder %s39, %s40
      %p54 = scmp.eq.s32.totalorder %s18, 1
      %p55 = por %p53, %p54
      %p57 = scmp.ne.s32.totalorder %s40, %s56
      %p58 = scmp.eq.s32.totalorder %s18, 0
      %p59 = por %p57, %p58
      %s61 = sadd.s32 %s60, 1
      %p64 = scmp.eq.s32.totalorder %s12, 1
      %p65 = scmp.ne.s32.totalorder %s60, %s62
      %p66 = scmp.eq.s32.totalorder %s12, 0
      %p67 = por %p65, %p66
      %p68 = scmp.ne.s32.totalorder %s60, %s62
      %p69 = scmp.eq.s32.totalorder %s17, 1
      %p70 = por %p68, %p69
      %p71 = scmp.ne.s32.totalorder %s62, %s63
      %p72 = scmp.eq.s32.totalorder %s17, 0
      %p73 = por %p71, %p72
      %p74 = scmp.ne.s32.totalorder %s62, %s63
      %p75 = scmp.eq.s32.totalorder %s18, 1
      %p76 = por %p74, %p75
      %p78 = scmp.ne.s32.totalorder %s63, %s77
      %p79 = scmp.eq.s32.totalorder %s18, 0
      %p80 = por %p78, %p79
      %s82 = sadd.s32 %s81, 1
      %p85 = scmp.eq.s32.totalorder %s12, 1
      %p86 = scmp.ne.s32.totalorder %s81, %s83
      %p87 = scmp.eq.s32.totalorder %s12, 0
      %p88 = por %p86, %p87
      %p89 = scmp.ne.s32.totalorder %s81, %s83
      %p90 = scmp.eq.s32.totalorder %s17, 1
      %p91 = por %p89, %p90
      %p92 = scmp.ne.s32.totalorder %s83, %s84
      %p93 = scmp.eq.s32.totalorder %s17, 0
      %p94 = por %p92, %p93
      %p95 = scmp.ne.s32.totalorder %s83, %s84
      %p96 = scmp.eq.s32.totalorder %s18, 1
      %p97 = por %p95, %p96
      %p99 = scmp.ne.s32.totalorder %s84, %s98
      %p100 = scmp.eq.s32.totalorder %s18, 0
      %p101 = por %p99, %p100
      %s102 = ssub.s32 %s19, %s31
      %s103 = ssub.s32 %s20, %s27
      %s104 = sor.u32 %s102, %s103
      %p105 = scmp.eq.s32.totalorder %s104, 0
      %s107 = sadd.s32 %s106, 1
      %s108 = scalar_select %p105, %s106, %s107
      %p111 = pneg %p105
      %p112 = scmp.eq.s32.totalorder %s12, 1
      %p113 = por %p111, %p112
      %p114 = scmp.ne.s32.totalorder %s106, %s109
      %p115 = scmp.eq.s32.totalorder %s12, 0
      %p116 = por %p114, %p115
      %p117 = scmp.ne.s32.totalorder %s106, %s109
      %p118 = scmp.eq.s32.totalorder %s17, 1
      %p119 = por %p117, %p118
      %p120 = scmp.ne.s32.totalorder %s109, %s110
      %p121 = scmp.eq.s32.totalorder %s17, 0
      %p122 = por %p120, %p121
      %p123 = scmp.ne.s32.totalorder %s109, %s110
      %p124 = scmp.eq.s32.totalorder %s18, 1
      %p125 = por %p123, %p124
      %p127 = scmp.ne.s32.totalorder %s110, %s126
      %p128 = scmp.eq.s32.totalorder %s18, 0
      %p129 = por %p127, %p128
      %p130 = scmp.le.s32.totalorder 1, %s12
      %p131 = scmp.lt.s32.totalorder %s12, 3
      %p132 = pnand %p130, %p131
      %p133 = pneg %p132
      // Predicated region
      $region9: #{tpu_custom_call.1} parent=5 // pred_check
        _
      $region10: #{tpu_custom_call.1} parent=5 // pred_check_branch
        %135 = sbr.rel (%p132) target = $region12
      $region11: #{tpu_custom_call.1} parent=5 // pred_region
        %s136 = ssub.s32 %s12, 1
        // Predicated region
        $region13: #{tpu_custom_call.1} parent=11 // pred_check
          %p137 = pneg %p73
        $region14: #{tpu_custom_call.1} parent=11 // pred_check_branch
          %139 = sbr.rel (%p137) target = $region16
        $region15: #{tpu_custom_call.1} parent=11 // pred_region
          _
        $region16: #{tpu_custom_call.1} parent=11 // pred_fallthru
          _
        // Predicated region
        $region17: #{tpu_custom_call.1} parent=11 // pred_check
          %p140 = pneg %p94
        $region18: #{tpu_custom_call.1} parent=11 // pred_check_branch
          %142 = sbr.rel (%p140) target = $region20
        $region19: #{tpu_custom_call.1} parent=11 // pred_region
          _
        $region20: #{tpu_custom_call.1} parent=11 // pred_fallthru
          _
      $region12: #{tpu_custom_call.1} parent=5 // pred_fallthru
        _
      %p143 = scmp.lt.s32.totalorder %s12, 2
      // Predicated region
      $region21: #{tpu_custom_call.1} parent=5 // pred_check
        %p144 = pneg %p143
      $region22: #{tpu_custom_call.1} parent=5 // pred_check_branch
        %146 = sbr.rel (%p144) target = $region24
      $region23: #{tpu_custom_call.1} parent=5 // pred_region
        // Predicated region
        $region25: #{tpu_custom_call.1} parent=23 // pred_check
          %p147 = pneg %p46
        $region26: #{tpu_custom_call.1} parent=23 // pred_check_branch
          %149 = sbr.rel (%p147) target = $region28
        $region27: #{tpu_custom_call.1} parent=23 // pred_region
          %p150 = scmp.lt.s32.totalorder %s19, 1
          %s151 = scalar_select %p150, %s19, 1
          %p152 = scmp.lt.s32.totalorder %s20, 0
          %s153 = scalar_select %p152, %s20, 0
          %s154 = smul.addr %s151, 8
          %s155 = sadd.s32 %s153, %s154
          %s156 = smul.addr %s155, 8
          %s157 = scalar_lea.vmem %s0, %s156
        $region28: #{tpu_custom_call.1} parent=23 // pred_fallthru
          _
      $region24: #{tpu_custom_call.1} parent=5 // pred_fallthru
        _
      %p158 = scmp.le.s32.totalorder 1, %s12
      %p159 = scmp.lt.s32.totalorder %s12, 3
      %p160 = pnand %p158, %p159
      %p161 = pneg %p160
      // Predicated region
      $region29: #{tpu_custom_call.1} parent=5 // pred_check
        _
      $region30: #{tpu_custom_call.1} parent=5 // pred_check_branch
        %163 = sbr.rel (%p160) target = $region32
      $region31: #{tpu_custom_call.1} parent=5 // pred_region
        %s164 = ssub.s32 %s12, 1
        %p165 = scmp.lt.s32.totalorder %s21, 1
        %s166 = scalar_select %p165, %s21, 1
        %p167 = scmp.lt.s32.totalorder %s22, 0
        %s168 = scalar_select %p167, %s22, 0
        %s169 = smul.addr %s166, 8
        %s170 = sadd.s32 %s168, %s169
        %s171 = smul.addr %s170, 8
        %s172 = scalar_lea.vmem %s0, %s171
        %p173 = pneg %p52
        %p174 = pneg %p49
        %p175 = pneg %p73
        %p176 = pneg %p70
        %p177 = pneg %p94
        %p178 = pneg %p91
        %p179 = pneg %p122
        %p180 = pneg %p119
        %s181 = sand.u32 %s109, 1
        %s182 = scalar_lea.sflag [#allocation3], %s181
        %s183 = sand.u32 %s109, 1
        %s184 = smul.addr %s183, 24
        %s185 = scalar_lea.vmem [#allocation2], %s184
        %p186 = scmp.lt.s32.totalorder %s21, 1
        %s187 = scalar_select %p186, %s21, 1
        %p188 = scmp.lt.s32.totalorder %s22, 0
        %s189 = scalar_select %p188, %s22, 0
        %s190 = smul.addr %s187, 8
        %s191 = sadd.s32 %s189, %s190
        %s192 = smul.addr %s191, 8
        %s193 = scalar_lea.vmem %s0, %s192
        %v195 = vld [vmem:[%s1] sm:$0xf]
        %v196 = vld [vmem:[%s1 + $0x4] sm:$0xf]
        %v197 = vld [vmem:[%s1 + $0x8] sm:$0xf]
        %v198 = vld [vmem:[%s193] sm:$0xff]
        %v199 = vld [vmem:[%s193 + $0x8] sm:$0xff]
        %v200 = vld [vmem:[%s193 + $0x10] sm:$0xff]
        %v201 = vld [vmem:[%s193 + $0x18] sm:$0xff]
        %v202 = vld [vmem:[%s193 + $0x20] sm:$0xff]
        %v203 = vld [vmem:[%s193 + $0x28] sm:$0xff]
        %v204 = vld [vmem:[%s193 + $0x30] sm:$0xff]
        %v205 = vld [vmem:[%s193 + $0x38] sm:$0xff]
        %v206 = vpack.c.bf16 %v199, %v198
        %v207 = vpack.c.bf16 %v201, %v200
        %v208 = vpack.c.bf16 %v203, %v202
        %v209 = vpack.c.bf16 %v205, %v204
        %v210 = vld [vmem:[%s2] sm:$0xff]
        %v211 = vld [vmem:[%s2 + $0x8] sm:$0xff]
        %v212 = vld [vmem:[%s2 + $0x10] sm:$0xff]
        %214 = vset.pattern.permute.xlu0 0
        %215 = vperm.xlu0 %214, %v210
        %v216 = vpop.permute.xlu0 %215
        %219 = vset.pattern.permute.xlu0 0
        %220 = vperm.xlu0 %219, %v211
        %v221 = vpop.permute.xlu0 %220
        %224 = vset.pattern.permute.xlu0 0
        %225 = vperm.xlu0 %224, %v212
        %v226 = vpop.permute.xlu0 %225
        %v231 = vunpack.c.l.b16 %v195
        %v232 = vunpack.c.l.b16 %v196
        %v233 = vunpack.c.l.b16 %v197
        %v234 = vpack.c.b16 %v232, %v231
        %v235 = vpack.c.b16 %v233, %v233
        %vm236 = vcmask 523264
        %v238 = vsel %vm236, %v234, 0
        %v241 = vsel %vm236, %v235, 0
        %243 = vmatprep.subr.bf16.mxu0 0
        %244 = vmatpush1.bf16.msra.mxu0 %v206
        %245 = vmatprep.subr.bf16.mxu0 0
        %246 = vmatpush1.bf16.msra.mxu0 %v207
        %247 = vmatprep.subr.bf16.mxu0 0
        %248 = vmatpush1.bf16.msra.mxu0 %v208
        %249 = vmatprep.subr.bf16.mxu0 0
        %250 = vmatpush1.bf16.msra.mxu0 %v209
        %251 = vmatprep.subr.bf16.mxu0 0
        %252 = vmatpush1.bf16.msra.mxu0 0
        %253 = vmatprep.subr.bf16.mxu0 0
        %254 = vmatpush1.bf16.msra.mxu0 0
        %255 = vmatprep.subr.bf16.mxu0 0
        %256 = vmatpush1.bf16.msra.mxu0 0
        %257 = vmatprep.subr.bf16.mxu0 0
        %258 = vmatpush1.bf16.msra.mxu0 0
        %259 = vmatprep.subr.bf16.mxu0 0
        %260 = vmatpush1.bf16.msra.mxu0 0
        %261 = vmatprep.subr.bf16.mxu0 0
        %262 = vmatpush1.bf16.msra.mxu0 0
        %263 = vmatprep.subr.bf16.mxu0 0
        %264 = vmatpush1.bf16.msra.mxu0 0
        %265 = vmatprep.subr.bf16.mxu0 0
        %266 = vmatpush1.bf16.msra.mxu0 0
        %267 = vmatprep.subr.bf16.mxu0 0
        %268 = vmatpush1.bf16.msra.mxu0 0
        %269 = vmatprep.subr.bf16.mxu0 0
        %270 = vmatpush1.bf16.msra.mxu0 0
        %271 = vmatprep.subr.bf16.mxu0 0
        %272 = vmatpush1.bf16.msra.mxu0 0
        %273 = vmatprep.subr.bf16.mxu0 0
        %274 = vmatpush1.bf16.msra.mxu0 0
        %275 = vmatprep.mubr.bf16.mxu0 0
        %276 = vmatmul.mubr.bf16.gmra.mrb[0].mxu0 %v238
        %v277 = vpop.f32.mrb[0].mxu0
        %v278 = vadd.f32 %v216, %v277
        %v279 = vpop.f32.mrb[0].mxu0
        %v280 = vpop.f32.mrb[0].mxu0
        %v281 = vadd.f32 %v221, %v280
        %v282 = vpop.f32.mrb[0].mxu0
        %283 = vmatprep.mubr.bf16.mxu0 0
        %284 = vmatmul.mubr.bf16.gmra.mrb[0].mxu0 %v241
        %v285 = vpop.f32.mrb[0].mxu0
        %v286 = vadd.f32 %v226, %v285
        %v287 = vpop.f32.mrb[0].mxu0
        %v288 = vpop.f32.mrb[0].mxu0
        %v289 = vpop.f32.mrb[0].mxu0
        %290 = vdwg.mxu0
        %vm291 = vcmask 400384
        %292 = vst.msk [vmem:[%s185] sm:$0xff] %vm291, %v278
        %293 = vst.msk [vmem:[%s185 + $0x8] sm:$0xff] %vm291, %v281
        %294 = vst.msk [vmem:[%s185 + $0x10] sm:$0xff] %vm291, %v286
        %s295 = sand.u32 %s109, 1
        %s296 = scalar_lea.sflag [#allocation3], %s295
        %s297 = sand.u32 %s109, 1
        %s298 = smul.addr %s297, 24
        %s299 = scalar_lea.vmem [#allocation2], %s298
        // Predicated region
        $region33: #{tpu_custom_call.1} parent=31 // pred_check
          %p300 = pneg %p119
        $region34: #{tpu_custom_call.1} parent=31 // pred_check_branch
          %302 = sbr.rel (%p300) target = $region36
        $region35: #{tpu_custom_call.1} parent=31 // pred_region
          %s304 = ssub.s32 384, 384
          %305 = vsyncadd %s296, %s304
          %s306 = smul.addr %s21, 3
          %s307 = sadd.s32 %s22, %s306
          %s308 = smul.addr %s307, 128
          %s309 = scalar_lea.hbm %s3, %s308
          %s310 = sshll.u32 %s299, 4
          %s311 = int_to_ptr.vmem [resolvable:$true] %s310
          %316 = dma.vmem_to_hbm [thread:$0]  %s311, 384, %s309, %s296, 128, 128, 8
        $region36: #{tpu_custom_call.1} parent=31 // pred_fallthru
          _
      $region32: #{tpu_custom_call.1} parent=5 // pred_fallthru
        _
      %p317 = scmp.le.s32.totalorder 2, %s12
      // Predicated region
      $region37: #{tpu_custom_call.1} parent=5 // pred_check
        %p318 = pneg %p317
      $region38: #{tpu_custom_call.1} parent=5 // pred_check_branch
        %320 = sbr.rel (%p318) target = $region40
      $region39: #{tpu_custom_call.1} parent=5 // pred_region
        %s321 = ssub.s32 %s12, 2
        // Predicated region
        $region41: #{tpu_custom_call.1} parent=39 // pred_check
          %p322 = pneg %p125
        $region42: #{tpu_custom_call.1} parent=39 // pred_check_branch
          %324 = sbr.rel (%p322) target = $region44
        $region43: #{tpu_custom_call.1} parent=39 // pred_region
          %s325 = sand.u32 %s110, 1
          %s326 = scalar_lea.sflag [#allocation3], %s325
          %s327 = sand.u32 %s110, 1
          %s328 = smul.addr %s327, 24
          %s329 = scalar_lea.vmem [#allocation2], %s328
          %330 = dma.done %s326, 384
        $region44: #{tpu_custom_call.1} parent=39 // pred_fallthru
          _
      $region40: #{tpu_custom_call.1} parent=5 // pred_fallthru
        _
    $region6: #{tpu_custom_call.1} parent=1 // loop_footer
      %s16 = sadd.s32 1, %s12
    $region7: #{tpu_custom_call.1} parent=1 // loop_footer_branch
      %11 = sbr.rel target = $region3
    $region8: #{tpu_custom_call.1} parent=1 // loop_exit
      _
    %331 = vsyncpa [#allocation3], 1
    %s332 = scalar_lea.sflag [#allocation3], 1
    %333 = vsyncpa %s332, 1

</llo_original>
